<compile_context>
chip_gen: v7x
topology: tpu7x:2x2x1
jax: 0.10.0
libtpu: 0.0.40
codegen_flags: <defaults>
</compile_context>

<pallas_src>
import jax
import jax.numpy as jnp
from jax import lax
from jax.experimental import pallas as pl
from jax.experimental.pallas import tpu as pltpu


def relu_conv1x1_kernel(x_ref, w_ref, o_ref):
    # x_ref: (Cin, TL) f32   w_ref: (Cout, Cin) f32 (resident)   o_ref: (TL, Cout) f32
    # ReLU commutes exactly with the bf16 downcast; bf16 VPU on v6e/v7x, f32 on v5e.
    x = jnp.maximum(x_ref[...].astype(jnp.bfloat16), 0)
    # In-kernel weight cast (weight is DMA'd once and stays resident); hidden under
    # the activation DMA, and avoids a standalone XLA cast op in the wrapper.
    w = w_ref[...].astype(jnp.bfloat16)
    # Lane-dense output: out^T = relu(X)^T @ W^T, contracting Cin (x dim 0, w dim 1).
    # Output block (TL, Cout=400) -> mostly unmasked stores, high MXU N-fill.
    o_ref[...] = lax.dot_general(
        x, w,
        dimension_numbers=(((0,), (1,)), ((), ())),
        preferred_element_type=jnp.float32,
    ).astype(o_ref.dtype)


def relu_conv1x1(x_nchw, weight, *, channels_last_out=False):
    """x_nchw: (N, Cin, H, W) float32; weight: (Cout, Cin, 1, 1) float32."""
    N, Cin, H, W = x_nchw.shape
    Cout = weight.shape[0]
    HW = H * W

    # Free reshapes only -- no transposes, no dtype casts in the wrapper.
    x3 = x_nchw.reshape(N, Cin, HW)        # (N, Cin, HW)
    w_mat = weight.reshape(Cout, Cin)      # (Cout, Cin) f32

    # HW tile: full extent when small, else 2048 (multiple of 128).
    # VMEM @ TL=2048 f32: ~2x3.3 MiB in + 2x3.3 MiB out + 2x0.64 MiB weight ~ 14 MiB,
    # under the 32 MiB default scoped VMEM on all gens (v7x physical VMEM is 64 MiB).
    TL = HW if HW <= 2048 else 2048
    grid = (N, pl.cdiv(HW, TL))

    itemsize = jnp.dtype(x_nchw.dtype).itemsize
    cost = pl.CostEstimate(
        flops=2 * N * HW * Cin * Cout,
        transcendentals=0,
        bytes_accessed=(N * Cin * HW * itemsize                 # activations in
                        + Cout * Cin * weight.dtype.itemsize    # f32 weight (once)
                        + N * Cout * HW * itemsize),            # output
    )

    out = pl.pallas_call(
        relu_conv1x1_kernel,
        out_shape=jax.ShapeDtypeStruct((N, HW, Cout), x_nchw.dtype),
        grid_spec=pltpu.PrefetchScalarGridSpec(
            num_scalar_prefetch=0,
            grid=grid,
            in_specs=[
                # activations: batch dim squeezed, tiled along HW
                pl.BlockSpec((None, Cin, TL), lambda n, j: (n, 0, j)),
                # weight: resident across all grid steps (constant index_map).
                # (pipeline_mode=pl.Buffered(1) would drop its second buffer; skipped
                #  to stay on the known-good path -- irrelevant at this footprint.)
                pl.BlockSpec((Cout, Cin), lambda n, j: (0, 0)),
            ],
            out_specs=pl.BlockSpec((None, TL, Cout), lambda n, j: (n, j, 0)),
        ),
        compiler_params=pltpu.CompilerParams(
            dimension_semantics=("parallel", "parallel")),
        cost_estimate=cost,
    )(x3, w_mat)

    if channels_last_out:
        return out.reshape(N, H, W, Cout)
    # NCHW module parity: one cheap (N*Cout*HW*4 bytes ~ 78 KB here) transpose.
    return jnp.swapaxes(out, 1, 2).reshape(N, Cout, H, W)


if __name__ == "__main__":
    key = jax.random.PRNGKey(0)
    kx, kw = jax.random.split(key)

    # Shapes implied by the module: input (1, 400, 7, 7), weight (400, 400, 1, 1)
    N, C, H, W = 1, 400, 7, 7
    x = jax.random.normal(kx, (N, C, H, W), dtype=jnp.float32)
    w = (jax.random.normal(kw, (C, C, 1, 1), dtype=jnp.float32)
         * (1.0 / jnp.sqrt(float(C))))  # deterministic, kaiming-ish scale

    y = jax.block_until_ready(relu_conv1x1(x, w))
    assert y.shape == (N, C, H, W)

    # Reference 1: bf16-operand / f32-accumulate path (matches kernel math closely).
    xr = jnp.maximum(x, 0.0).reshape(N, C, H * W)
    ref_bf16 = jnp.einsum(
        "oc,nck->nok",
        w.reshape(C, C).astype(jnp.bfloat16),
        xr.astype(jnp.bfloat16),
        preferred_element_type=jnp.float32,
    ).reshape(N, C, H, W)
    assert jnp.allclose(y, ref_bf16, atol=5e-3, rtol=5e-3)

    # Reference 2: full f32 module semantics (looser tolerance due to bf16 operands).
    ref_f32 = jnp.einsum("oc,nck->nok", w.reshape(C, C), xr).reshape(N, C, H, W)
    assert jnp.allclose(y, ref_f32, atol=5e-2, rtol=5e-2)

    # Extra smoke test of the lane-dense / multi-step grid path (N>1, HW>=128).
    N2, H2, W2 = 2, 16, 16
    x2 = jax.random.normal(kx, (N2, C, H2, W2), dtype=jnp.float32)
    y2 = jax.block_until_ready(relu_conv1x1(x2, w))
    xr2 = jnp.maximum(x2, 0.0).reshape(N2, C, H2 * W2)
    ref2 = jnp.einsum("oc,nck->nok", w.reshape(C, C), xr2).reshape(N2, C, H2, W2)
    assert y2.shape == (N2, C, H2, W2)
    assert jnp.allclose(y2, ref2, atol=5e-2, rtol=5e-2)

    print("KERNEL_OK")
</pallas_src>

<mosaic_0001>
module attributes {stable_mosaic.version = 11 : i64} {
  func.func @relu_conv1x1_kernel(%arg0: i32, %arg1: i32, %arg2: memref<1x400x49xf32, #tpu.memory_space<vmem>>, %arg3: memref<400x400xf32, #tpu.memory_space<vmem>>, %arg4: memref<1x49x400xf32, #tpu.memory_space<vmem>>) attributes {dimension_semantics = [#tpu.dimension_semantics<parallel>, #tpu.dimension_semantics<parallel>], iteration_bounds = array<i64: 1, 1>, scalar_prefetch = 0 : i64, scratch_operands = 0 : i64, tpu.core_type = #tpu.core_type<tc>, window_params = [{transform_indices = @transform_0, window_bounds = array<i64: 1, 400, 49>}, {pipeline_mode = #tpu.pipeline_mode<synchronous>, transform_indices = @transform_1, window_bounds = array<i64: 400, 400>}, {transform_indices = @transform_2, window_bounds = array<i64: 1, 49, 400>}]} {
    %c0 = arith.constant 0 : index
    %c0_0 = arith.constant 0 : index
    %c0_1 = arith.constant 0 : index
    %0 = vector.load %arg2[%c0, %c0_0, %c0_1] : memref<1x400x49xf32, #tpu.memory_space<vmem>>, vector<1x400x49xf32>
    %1 = vector.shape_cast %0 : vector<1x400x49xf32> to vector<400x49xf32>
    %2 = arith.truncf %1 : vector<400x49xf32> to vector<400x49xbf16>
    %cst = arith.constant 0.000000e+00 : bf16
    %3 = vector.broadcast %cst : bf16 to vector<400x49xbf16>
    %4 = arith.maximumf %2, %3 : vector<400x49xbf16>
    %c0_2 = arith.constant 0 : index
    %c0_3 = arith.constant 0 : index
    %5 = vector.load %arg3[%c0_2, %c0_3] : memref<400x400xf32, #tpu.memory_space<vmem>>, vector<400x400xf32>
    %6 = arith.truncf %5 : vector<400x400xf32> to vector<400x400xbf16>
    %cst_4 = arith.constant dense<0.000000e+00> : vector<49x400xf32>
    %7 = tpu.matmul %4, %6, %cst_4 {dimension_numbers = #tpu.dot_dimension_numbers<[0], [1], [1], [0], [0, 1, 1, 0], [], []>} : vector<400x49xbf16>, vector<400x400xbf16>, vector<49x400xf32> -> vector<49x400xf32>
    %c0_5 = arith.constant 0 : index
    %c0_6 = arith.constant 0 : index
    %c0_7 = arith.constant 0 : index
    %8 = vector.load %arg4[%c0_5, %c0_6, %c0_7] : memref<1x49x400xf32, #tpu.memory_space<vmem>>, vector<1x49x400xf32>
    %9 = vector.shape_cast %8 : vector<1x49x400xf32> to vector<49x400xf32>
    %10 = vector.shape_cast %7 : vector<49x400xf32> to vector<1x49x400xf32>
    tpu.vector_store %arg4[%c0_5, %c0_6, %c0_7], %10 {strides = array<i32>} : memref<1x49x400xf32, #tpu.memory_space<vmem>>, vector<1x49x400xf32>,
    return
  }
  func.func @transform_0(%arg0: i32, %arg1: i32) -> (i32, i32, i32) {
    %c0_i32 = arith.constant 0 : i32
    %c0_i32_0 = arith.constant 0 : i32
    return %arg0, %c0_i32, %arg1 : i32, i32, i32
  }
  func.func @transform_1(%arg0: i32, %arg1: i32) -> (i32, i32) {
    %c0_i32 = arith.constant 0 : i32
    %c0_i32_0 = arith.constant 0 : i32
    %c0_i32_1 = arith.constant 0 : i32
    return %c0_i32, %c0_i32_0 : i32, i32
  }
  func.func @transform_2(%arg0: i32, %arg1: i32) -> (i32, i32, i32) {
    %c0_i32 = arith.constant 0 : i32
    %c0_i32_0 = arith.constant 0 : i32
    return %arg0, %arg1, %c0_i32 : i32, i32, i32
  }
}

</mosaic_0001>

<llo_original>
// kernel: tpu_custom_call.1
$region0: #{tpu_custom_call.1}
  #allocation0 [shape = 'u32[]', space=smem, size = 0x4, offset = 0x4, fixed_abs, tag = 'smem constant byte address 0x4 - core index']
  #allocation1 [shape = 'u32[144,128]{1,0:T(1,128)}', space=vmem, size = 0x12000, scoped, tag = 'internal scratch']
  %s0 = inlined_call_operand.vmem [shape: f32[1,400,49], index: 0, kind: input, shape index: {}]
  %s1 = inlined_call_operand.hbm [shape: f32[400,400], index: 1, kind: input, shape index: {}]
  %s2 = inlined_call_operand.vmem [shape: f32[1,49,400], index: 2, kind: output, shape index: {}]
  %s3 = sld [smem:[#allocation0]]
  $region22: #{tpu_custom_call.1} parent=0
    _
  %s5 = ssub.s32 1, %s3
  %s6 = scalar_select 0, %s5, %s3
  $region1: #{tpu_custom_call.1} parent=0
    #allocation2 [shape = 'u8[819200]{0}', space=vmem, size = 0xc8000, scoped, tag = 'input window, operand 1, single buffered']
    #allocation3 [shape = 's32[1]{0}', space=sflag, size = 0x4, scoped, tag = 'scoped memory for tpu_custom_call.1']
    %7 = vsyncpa [#allocation3], 0
    // Predicated region
    $region2: #{tpu_custom_call.1} parent=1 // pred_check
      _
    $region3: #{tpu_custom_call.1} parent=1 // pred_check_branch
      %9 = sbr.rel (0) target = $region5
    $region4: #{tpu_custom_call.1} parent=1 // pred_region
      _
    $region5: #{tpu_custom_call.1} parent=1 // pred_fallthru
      _
    // Predicated region
    $region6: #{tpu_custom_call.1} parent=1 // pred_check
      _
    $region7: #{tpu_custom_call.1} parent=1 // pred_check_branch
      %11 = sbr.rel (0) target = $region9
    $region8: #{tpu_custom_call.1} parent=1 // pred_region
      %s13 = ssub.s32 25600, 25600
      %14 = vsyncadd [#allocation3], %s13
      %s15 = sshll.u32 [#allocation2], 4
      %s16 = int_to_ptr.vmem [resolvable:$true] %s15
      %21 = dma.hbm_to_vmem [thread:$0]  %s1, 25600, %s16, [#allocation3], 512, 512, 32
    $region9: #{tpu_custom_call.1} parent=1 // pred_fallthru
      _
    // Predicated region
    $region10: #{tpu_custom_call.1} parent=1 // pred_check
      _
    $region11: #{tpu_custom_call.1} parent=1 // pred_check_branch
      %23 = sbr.rel (0) target = $region13
    $region12: #{tpu_custom_call.1} parent=1 // pred_region
      %24 = dma.done [#allocation3], 25600
    $region13: #{tpu_custom_call.1} parent=1 // pred_fallthru
      _
    %v26 = vld [vmem:[%s0] sm:$0xff]
    %v27 = vld [vmem:[%s0 + $0x8] sm:$0xff]
    %v28 = vld [vmem:[%s0 + $0x10] sm:$0xff]
    %v29 = vld [vmem:[%s0 + $0x18] sm:$0xff]
    %v30 = vld [vmem:[%s0 + $0x20] sm:$0xff]
    %v31 = vld [vmem:[%s0 + $0x28] sm:$0xff]
    %v32 = vld [vmem:[%s0 + $0x30] sm:$0xff]
    %v33 = vld [vmem:[%s0 + $0x38] sm:$0xff]
    %v34 = vld [vmem:[%s0 + $0x40] sm:$0xff]
    %v35 = vld [vmem:[%s0 + $0x48] sm:$0xff]
    %v36 = vld [vmem:[%s0 + $0x50] sm:$0xff]
    %v37 = vld [vmem:[%s0 + $0x58] sm:$0xff]
    %v38 = vld [vmem:[%s0 + $0x60] sm:$0xff]
    %v39 = vld [vmem:[%s0 + $0x68] sm:$0xff]
    %v40 = vld [vmem:[%s0 + $0x70] sm:$0xff]
    %v41 = vld [vmem:[%s0 + $0x78] sm:$0xff]
    %v42 = vld [vmem:[%s0 + $0x80] sm:$0xff]
    %v43 = vld [vmem:[%s0 + $0x88] sm:$0xff]
    %v44 = vld [vmem:[%s0 + $0x90] sm:$0xff]
    %v45 = vld [vmem:[%s0 + $0x98] sm:$0xff]
    %v46 = vld [vmem:[%s0 + $0xa0] sm:$0xff]
    %v47 = vld [vmem:[%s0 + $0xa8] sm:$0xff]
    %v48 = vld [vmem:[%s0 + $0xb0] sm:$0xff]
    %v49 = vld [vmem:[%s0 + $0xb8] sm:$0xff]
    %v50 = vld [vmem:[%s0 + $0xc0] sm:$0xff]
    %v51 = vld [vmem:[%s0 + $0xc8] sm:$0xff]
    %v52 = vld [vmem:[%s0 + $0xd0] sm:$0xff]
    %v53 = vld [vmem:[%s0 + $0xd8] sm:$0xff]
    %v54 = vld [vmem:[%s0 + $0xe0] sm:$0xff]
    %v55 = vld [vmem:[%s0 + $0xe8] sm:$0xff]
    %v56 = vld [vmem:[%s0 + $0xf0] sm:$0xff]
    %v57 = vld [vmem:[%s0 + $0xf8] sm:$0xff]
    %v58 = vld [vmem:[%s0 + $0x100] sm:$0xff]
    %v59 = vld [vmem:[%s0 + $0x108] sm:$0xff]
    %v60 = vld [vmem:[%s0 + $0x110] sm:$0xff]
    %v61 = vld [vmem:[%s0 + $0x118] sm:$0xff]
    %v62 = vld [vmem:[%s0 + $0x120] sm:$0xff]
    %v63 = vld [vmem:[%s0 + $0x128] sm:$0xff]
    %v64 = vld [vmem:[%s0 + $0x130] sm:$0xff]
    %v65 = vld [vmem:[%s0 + $0x138] sm:$0xff]
    %v66 = vld [vmem:[%s0 + $0x140] sm:$0xff]
    %v67 = vld [vmem:[%s0 + $0x148] sm:$0xff]
    %v68 = vld [vmem:[%s0 + $0x150] sm:$0xff]
    %v69 = vld [vmem:[%s0 + $0x158] sm:$0xff]
    %v70 = vld [vmem:[%s0 + $0x160] sm:$0xff]
    %v71 = vld [vmem:[%s0 + $0x168] sm:$0xff]
    %v72 = vld [vmem:[%s0 + $0x170] sm:$0xff]
    %v73 = vld [vmem:[%s0 + $0x178] sm:$0xff]
    %v74 = vld [vmem:[%s0 + $0x180] sm:$0xff]
    %v75 = vld [vmem:[%s0 + $0x188] sm:$0xff]
    %v76 = vpack.c.bf16 %v27, %v26
    %v77 = vpack.c.bf16 %v29, %v28
    %v78 = vpack.c.bf16 %v31, %v30
    %v79 = vpack.c.bf16 %v33, %v32
    %v80 = vpack.c.bf16 %v35, %v34
    %v81 = vpack.c.bf16 %v37, %v36
    %v82 = vpack.c.bf16 %v39, %v38
    %v83 = vpack.c.bf16 %v41, %v40
    %v84 = vpack.c.bf16 %v43, %v42
    %v85 = vpack.c.bf16 %v45, %v44
    %v86 = vpack.c.bf16 %v47, %v46
    %v87 = vpack.c.bf16 %v49, %v48
    %v88 = vpack.c.bf16 %v51, %v50
    %v89 = vpack.c.bf16 %v53, %v52
    %v90 = vpack.c.bf16 %v55, %v54
    %v91 = vpack.c.bf16 %v57, %v56
    %v92 = vpack.c.bf16 %v59, %v58
    %v93 = vpack.c.bf16 %v61, %v60
    %v94 = vpack.c.bf16 %v63, %v62
    %v95 = vpack.c.bf16 %v65, %v64
    %v96 = vpack.c.bf16 %v67, %v66
    %v97 = vpack.c.bf16 %v69, %v68
    %v98 = vpack.c.bf16 %v71, %v70
    %v99 = vpack.c.bf16 %v73, %v72
    %v100 = vpack.c.bf16 %v75, %v74
    %v101 = vmax.bf16 %v76, 0
    %v102 = vmax.bf16 %v77, 0
    %v103 = vmax.bf16 %v78, 0
    %v104 = vmax.bf16 %v79, 0
    %v105 = vmax.bf16 %v80, 0
    %v106 = vmax.bf16 %v81, 0
    %v107 = vmax.bf16 %v82, 0
    %v108 = vmax.bf16 %v83, 0
    %v109 = vmax.bf16 %v84, 0
    %v110 = vmax.bf16 %v85, 0
    %v111 = vmax.bf16 %v86, 0
    %v112 = vmax.bf16 %v87, 0
    %v113 = vmax.bf16 %v88, 0
    %v114 = vmax.bf16 %v89, 0
    %v115 = vmax.bf16 %v90, 0
    %v116 = vmax.bf16 %v91, 0
    %v117 = vmax.bf16 %v92, 0
    %v118 = vmax.bf16 %v93, 0
    %v119 = vmax.bf16 %v94, 0
    %v120 = vmax.bf16 %v95, 0
    %v121 = vmax.bf16 %v96, 0
    %v122 = vmax.bf16 %v97, 0
    %v123 = vmax.bf16 %v98, 0
    %v124 = vmax.bf16 %v99, 0
    %v125 = vmax.bf16 %v100, 0
    %v126 = vld [vmem:[#allocation2] sm:$0xff]
    %v127 = vld [vmem:[#allocation2 + $0x8] sm:$0xff]
    %v128 = vld [vmem:[#allocation2 + $0x10] sm:$0xff]
    %v129 = vld [vmem:[#allocation2 + $0x18] sm:$0xff]
    %v130 = vld [vmem:[#allocation2 + $0x20] sm:$0xff]
    %v131 = vld [vmem:[#allocation2 + $0x28] sm:$0xff]
    %v132 = vld [vmem:[#allocation2 + $0x30] sm:$0xff]
    %v133 = vld [vmem:[#allocation2 + $0x38] sm:$0xff]
    %v134 = vld [vmem:[#allocation2 + $0x40] sm:$0xff]
    %v135 = vld [vmem:[#allocation2 + $0x48] sm:$0xff]
    %v136 = vld [vmem:[#allocation2 + $0x50] sm:$0xff]
    %v137 = vld [vmem:[#allocation2 + $0x58] sm:$0xff]
    %v138 = vld [vmem:[#allocation2 + $0x60] sm:$0xff]
    %v139 = vld [vmem:[#allocation2 + $0x68] sm:$0xff]
    %v140 = vld [vmem:[#allocation2 + $0x70] sm:$0xff]
    %v141 = vld [vmem:[#allocation2 + $0x78] sm:$0xff]
    %v142 = vld [vmem:[#allocation2 + $0x80] sm:$0xff]
    %v143 = vld [vmem:[#allocation2 + $0x88] sm:$0xff]
    %v144 = vld [vmem:[#allocation2 + $0x90] sm:$0xff]
    %v145 = vld [vmem:[#allocation2 + $0x98] sm:$0xff]
    %v146 = vld [vmem:[#allocation2 + $0xa0] sm:$0xff]
    %v147 = vld [vmem:[#allocation2 + $0xa8] sm:$0xff]
    %v148 = vld [vmem:[#allocation2 + $0xb0] sm:$0xff]
    %v149 = vld [vmem:[#allocation2 + $0xb8] sm:$0xff]
    %v150 = vld [vmem:[#allocation2 + $0xc0] sm:$0xff]
    %v151 = vld [vmem:[#allocation2 + $0xc8] sm:$0xff]
    %v152 = vld [vmem:[#allocation2 + $0xd0] sm:$0xff]
    %v153 = vld [vmem:[#allocation2 + $0xd8] sm:$0xff]
    %v154 = vld [vmem:[#allocation2 + $0xe0] sm:$0xff]
    %v155 = vld [vmem:[#allocation2 + $0xe8] sm:$0xff]
    %v156 = vld [vmem:[#allocation2 + $0xf0] sm:$0xff]
    %v157 = vld [vmem:[#allocation2 + $0xf8] sm:$0xff]
    %v158 = vld [vmem:[#allocation2 + $0x100] sm:$0xff]
    %v159 = vld [vmem:[#allocation2 + $0x108] sm:$0xff]
    %v160 = vld [vmem:[#allocation2 + $0x110] sm:$0xff]
    %v161 = vld [vmem:[#allocation2 + $0x118] sm:$0xff]
    %v162 = vld [vmem:[#allocation2 + $0x120] sm:$0xff]
    %v163 = vld [vmem:[#allocation2 + $0x128] sm:$0xff]
    %v164 = vld [vmem:[#allocation2 + $0x130] sm:$0xff]
    %v165 = vld [vmem:[#allocation2 + $0x138] sm:$0xff]
    %v166 = vld [vmem:[#allocation2 + $0x140] sm:$0xff]
    %v167 = vld [vmem:[#allocation2 + $0x148] sm:$0xff]
    %v168 = vld [vmem:[#allocation2 + $0x150] sm:$0xff]
    %v169 = vld [vmem:[#allocation2 + $0x158] sm:$0xff]
    %v170 = vld [vmem:[#allocation2 + $0x160] sm:$0xff]
    %v171 = vld [vmem:[#allocation2 + $0x168] sm:$0xff]
    %v172 = vld [vmem:[#allocation2 + $0x170] sm:$0xff]
    %v173 = vld [vmem:[#allocation2 + $0x178] sm:$0xff]
    %v174 = vld [vmem:[#allocation2 + $0x180] sm:$0xff]
    %v175 = vld [vmem:[#allocation2 + $0x188] sm:$0xff]
    %v176 = vld [vmem:[#allocation2 + $0x190] sm:$0xff]
    %v177 = vld [vmem:[#allocation2 + $0x198] sm:$0xff]
    %v178 = vld [vmem:[#allocation2 + $0x1a0] sm:$0xff]
    %v179 = vld [vmem:[#allocation2 + $0x1a8] sm:$0xff]
    %v180 = vld [vmem:[#allocation2 + $0x1b0] sm:$0xff]
    %v181 = vld [vmem:[#allocation2 + $0x1b8] sm:$0xff]
    %v182 = vld [vmem:[#allocation2 + $0x1c0] sm:$0xff]
    %v183 = vld [vmem:[#allocation2 + $0x1c8] sm:$0xff]
    %v184 = vld [vmem:[#allocation2 + $0x1d0] sm:$0xff]
    %v185 = vld [vmem:[#allocation2 + $0x1d8] sm:$0xff]
    %v186 = vld [vmem:[#allocation2 + $0x1e0] sm:$0xff]
    %v187 = vld [vmem:[#allocation2 + $0x1e8] sm:$0xff]
    %v188 = vld [vmem:[#allocation2 + $0x1f0] sm:$0xff]
    %v189 = vld [vmem:[#allocation2 + $0x1f8] sm:$0xff]
    %v190 = vld [vmem:[#allocation2 + $0x200] sm:$0xff]
    %v191 = vld [vmem:[#allocation2 + $0x208] sm:$0xff]
    %v192 = vld [vmem:[#allocation2 + $0x210] sm:$0xff]
    %v193 = vld [vmem:[#allocation2 + $0x218] sm:$0xff]
    %v194 = vld [vmem:[#allocation2 + $0x220] sm:$0xff]
    %v195 = vld [vmem:[#allocation2 + $0x228] sm:$0xff]
    %v196 = vld [vmem:[#allocation2 + $0x230] sm:$0xff]
    %v197 = vld [vmem:[#allocation2 + $0x238] sm:$0xff]
    %v198 = vld [vmem:[#allocation2 + $0x240] sm:$0xff]
    %v199 = vld [vmem:[#allocation2 + $0x248] sm:$0xff]
    %v200 = vld [vmem:[#allocation2 + $0x250] sm:$0xff]
    %v201 = vld [vmem:[#allocation2 + $0x258] sm:$0xff]
    %v202 = vld [vmem:[#allocation2 + $0x260] sm:$0xff]
    %v203 = vld [vmem:[#allocation2 + $0x268] sm:$0xff]
    %v204 = vld [vmem:[#allocation2 + $0x270] sm:$0xff]
    %v205 = vld [vmem:[#allocation2 + $0x278] sm:$0xff]
    %v206 = vld [vmem:[#allocation2 + $0x280] sm:$0xff]
    %v207 = vld [vmem:[#allocation2 + $0x288] sm:$0xff]
    %v208 = vld [vmem:[#allocation2 + $0x290] sm:$0xff]
    %v209 = vld [vmem:[#allocation2 + $0x298] sm:$0xff]
    %v210 = vld [vmem:[#allocation2 + $0x2a0] sm:$0xff]
    %v211 = vld [vmem:[#allocation2 + $0x2a8] sm:$0xff]
    %v212 = vld [vmem:[#allocation2 + $0x2b0] sm:$0xff]
    %v213 = vld [vmem:[#allocation2 + $0x2b8] sm:$0xff]
    %v214 = vld [vmem:[#allocation2 + $0x2c0] sm:$0xff]
    %v215 = vld [vmem:[#allocation2 + $0x2c8] sm:$0xff]
    %v216 = vld [vmem:[#allocation2 + $0x2d0] sm:$0xff]
    %v217 = vld [vmem:[#allocation2 + $0x2d8] sm:$0xff]
    %v218 = vld [vmem:[#allocation2 + $0x2e0] sm:$0xff]
    %v219 = vld [vmem:[#allocation2 + $0x2e8] sm:$0xff]
    %v220 = vld [vmem:[#allocation2 + $0x2f0] sm:$0xff]
    %v221 = vld [vmem:[#allocation2 + $0x2f8] sm:$0xff]
    %v222 = vld [vmem:[#allocation2 + $0x300] sm:$0xff]
    %v223 = vld [vmem:[#allocation2 + $0x308] sm:$0xff]
    %v224 = vld [vmem:[#allocation2 + $0x310] sm:$0xff]
    %v225 = vld [vmem:[#allocation2 + $0x318] sm:$0xff]
    %v226 = vld [vmem:[#allocation2 + $0x320] sm:$0xff]
    %v227 = vld [vmem:[#allocation2 + $0x328] sm:$0xff]
    %v228 = vld [vmem:[#allocation2 + $0x330] sm:$0xff]
    %v229 = vld [vmem:[#allocation2 + $0x338] sm:$0xff]
    %v230 = vld [vmem:[#allocation2 + $0x340] sm:$0xff]
    %v231 = vld [vmem:[#allocation2 + $0x348] sm:$0xff]
    %v232 = vld [vmem:[#allocation2 + $0x350] sm:$0xff]
    %v233 = vld [vmem:[#allocation2 + $0x358] sm:$0xff]
    %v234 = vld [vmem:[#allocation2 + $0x360] sm:$0xff]
    %v235 = vld [vmem:[#allocation2 + $0x368] sm:$0xff]
    %v236 = vld [vmem:[#allocation2 + $0x370] sm:$0xff]
    %v237 = vld [vmem:[#allocation2 + $0x378] sm:$0xff]
    %v238 = vld [vmem:[#allocation2 + $0x380] sm:$0xff]
    %v239 = vld [vmem:[#allocation2 + $0x388] sm:$0xff]
    %v240 = vld [vmem:[#allocation2 + $0x390] sm:$0xff]
    %v241 = vld [vmem:[#allocation2 + $0x398] sm:$0xff]
    %v242 = vld [vmem:[#allocation2 + $0x3a0] sm:$0xff]
    %v243 = vld [vmem:[#allocation2 + $0x3a8] sm:$0xff]
    %v244 = vld [vmem:[#allocation2 + $0x3b0] sm:$0xff]
    %v245 = vld [vmem:[#allocation2 + $0x3b8] sm:$0xff]
    %v246 = vld [vmem:[#allocation2 + $0x3c0] sm:$0xff]
    %v247 = vld [vmem:[#allocation2 + $0x3c8] sm:$0xff]
    %v248 = vld [vmem:[#allocation2 + $0x3d0] sm:$0xff]
    %v249 = vld [vmem:[#allocation2 + $0x3d8] sm:$0xff]
    %v250 = vld [vmem:[#allocation2 + $0x3e0] sm:$0xff]
    %v251 = vld [vmem:[#allocation2 + $0x3e8] sm:$0xff]
    %v252 = vld [vmem:[#allocation2 + $0x3f0] sm:$0xff]
    %v253 = vld [vmem:[#allocation2 + $0x3f8] sm:$0xff]
    %v254 = vld [vmem:[#allocation2 + $0x400] sm:$0xff]
    %v255 = vld [vmem:[#allocation2 + $0x408] sm:$0xff]
    %v256 = vld [vmem:[#allocation2 + $0x410] sm:$0xff]
    %v257 = vld [vmem:[#allocation2 + $0x418] sm:$0xff]
    %v258 = vld [vmem:[#allocation2 + $0x420] sm:$0xff]
    %v259 = vld [vmem:[#allocation2 + $0x428] sm:$0xff]
    %v260 = vld [vmem:[#allocation2 + $0x430] sm:$0xff]
    %v261 = vld [vmem:[#allocation2 + $0x438] sm:$0xff]
    %v262 = vld [vmem:[#allocation2 + $0x440] sm:$0xff]
    %v263 = vld [vmem:[#allocation2 + $0x448] sm:$0xff]
    %v264 = vld [vmem:[#allocation2 + $0x450] sm:$0xff]
    %v265 = vld [vmem:[#allocation2 + $0x458] sm:$0xff]
    %v266 = vld [vmem:[#allocation2 + $0x460] sm:$0xff]
    %v267 = vld [vmem:[#allocation2 + $0x468] sm:$0xff]
    %v268 = vld [vmem:[#allocation2 + $0x470] sm:$0xff]
    %v269 = vld [vmem:[#allocation2 + $0x478] sm:$0xff]
    %v270 = vld [vmem:[#allocation2 + $0x480] sm:$0xff]
    %v271 = vld [vmem:[#allocation2 + $0x488] sm:$0xff]
    %v272 = vld [vmem:[#allocation2 + $0x490] sm:$0xff]
    %v273 = vld [vmem:[#allocation2 + $0x498] sm:$0xff]
    %v274 = vld [vmem:[#allocation2 + $0x4a0] sm:$0xff]
    %v275 = vld [vmem:[#allocation2 + $0x4a8] sm:$0xff]
    %v276 = vld [vmem:[#allocation2 + $0x4b0] sm:$0xff]
    %v277 = vld [vmem:[#allocation2 + $0x4b8] sm:$0xff]
    %v278 = vld [vmem:[#allocation2 + $0x4c0] sm:$0xff]
    %v279 = vld [vmem:[#allocation2 + $0x4c8] sm:$0xff]
    %v280 = vld [vmem:[#allocation2 + $0x4d0] sm:$0xff]
    %v281 = vld [vmem:[#allocation2 + $0x4d8] sm:$0xff]
    %v282 = vld [vmem:[#allocation2 + $0x4e0] sm:$0xff]
    %v283 = vld [vmem:[#allocation2 + $0x4e8] sm:$0xff]
    %v284 = vld [vmem:[#allocation2 + $0x4f0] sm:$0xff]
    %v285 = vld [vmem:[#allocation2 + $0x4f8] sm:$0xff]
    %v286 = vld [vmem:[#allocation2 + $0x500] sm:$0xff]
    %v287 = vld [vmem:[#allocation2 + $0x508] sm:$0xff]
    %v288 = vld [vmem:[#allocation2 + $0x510] sm:$0xff]
    %v289 = vld [vmem:[#allocation2 + $0x518] sm:$0xff]
    %v290 = vld [vmem:[#allocation2 + $0x520] sm:$0xff]
    %v291 = vld [vmem:[#allocation2 + $0x528] sm:$0xff]
    %v292 = vld [vmem:[#allocation2 + $0x530] sm:$0xff]
    %v293 = vld [vmem:[#allocation2 + $0x538] sm:$0xff]
    %v294 = vld [vmem:[#allocation2 + $0x540] sm:$0xff]
    %v295 = vld [vmem:[#allocation2 + $0x548] sm:$0xff]
    %v296 = vld [vmem:[#allocation2 + $0x550] sm:$0xff]
    %v297 = vld [vmem:[#allocation2 + $0x558] sm:$0xff]
    %v298 = vld [vmem:[#allocation2 + $0x560] sm:$0xff]
    %v299 = vld [vmem:[#allocation2 + $0x568] sm:$0xff]
    %v300 = vld [vmem:[#allocation2 + $0x570] sm:$0xff]
    %v301 = vld [vmem:[#allocation2 + $0x578] sm:$0xff]
    %v302 = vld [vmem:[#allocation2 + $0x580] sm:$0xff]
    %v303 = vld [vmem:[#allocation2 + $0x588] sm:$0xff]
    %v304 = vld [vmem:[#allocation2 + $0x590] sm:$0xff]
    %v305 = vld [vmem:[#allocation2 + $0x598] sm:$0xff]
    %v306 = vld [vmem:[#allocation2 + $0x5a0] sm:$0xff]
    %v307 = vld [vmem:[#allocation2 + $0x5a8] sm:$0xff]
    %v308 = vld [vmem:[#allocation2 + $0x5b0] sm:$0xff]
    %v309 = vld [vmem:[#allocation2 + $0x5b8] sm:$0xff]
    %v310 = vld [vmem:[#allocation2 + $0x5c0] sm:$0xff]
    %v311 = vld [vmem:[#allocation2 + $0x5c8] sm:$0xff]
    %v312 = vld [vmem:[#allocation2 + $0x5d0] sm:$0xff]
    %v313 = vld [vmem:[#allocation2 + $0x5d8] sm:$0xff]
    %v314 = vld [vmem:[#allocation2 + $0x5e0] sm:$0xff]
    %v315 = vld [vmem:[#allocation2 + $0x5e8] sm:$0xff]
    %v316 = vld [vmem:[#allocation2 + $0x5f0] sm:$0xff]
    %v317 = vld [vmem:[#allocation2 + $0x5f8] sm:$0xff]
    %v318 = vld [vmem:[#allocation2 + $0x600] sm:$0xff]
    %v319 = vld [vmem:[#allocation2 + $0x608] sm:$0xff]
    %v320 = vld [vmem:[#allocation2 + $0x610] sm:$0xff]
    %v321 = vld [vmem:[#allocation2 + $0x618] sm:$0xff]
    %v322 = vld [vmem:[#allocation2 + $0x620] sm:$0xff]
    %v323 = vld [vmem:[#allocation2 + $0x628] sm:$0xff]
    %v324 = vld [vmem:[#allocation2 + $0x630] sm:$0xff]
    %v325 = vld [vmem:[#allocation2 + $0x638] sm:$0xff]
    %v326 = vpack.c.bf16 %v130, %v126
    %v327 = vpack.c.bf16 %v131, %v127
    %v328 = vpack.c.bf16 %v132, %v128
    %v329 = vpack.c.bf16 %v133, %v129
    %v330 = vpack.c.bf16 %v138, %v134
    %v331 = vpack.c.bf16 %v139, %v135
    %v332 = vpack.c.bf16 %v140, %v136
    %v333 = vpack.c.bf16 %v141, %v137
    %v334 = vpack.c.bf16 %v146, %v142
    %v335 = vpack.c.bf16 %v147, %v143
    %v336 = vpack.c.bf16 %v148, %v144
    %v337 = vpack.c.bf16 %v149, %v145
    %v338 = vpack.c.bf16 %v154, %v150
    %v339 = vpack.c.bf16 %v155, %v151
    %v340 = vpack.c.bf16 %v156, %v152
    %v341 = vpack.c.bf16 %v157, %v153
    %v342 = vpack.c.bf16 %v162, %v158
    %v343 = vpack.c.bf16 %v163, %v159
    %v344 = vpack.c.bf16 %v164, %v160
    %v345 = vpack.c.bf16 %v165, %v161
    %v346 = vpack.c.bf16 %v170, %v166
    %v347 = vpack.c.bf16 %v171, %v167
    %v348 = vpack.c.bf16 %v172, %v168
    %v349 = vpack.c.bf16 %v173, %v169
    %v350 = vpack.c.bf16 %v178, %v174
    %v351 = vpack.c.bf16 %v179, %v175
    %v352 = vpack.c.bf16 %v180, %v176
    %v353 = vpack.c.bf16 %v181, %v177
    %v354 = vpack.c.bf16 %v186, %v182
    %v355 = vpack.c.bf16 %v187, %v183
    %v356 = vpack.c.bf16 %v188, %v184
    %v357 = vpack.c.bf16 %v189, %v185
    %v358 = vpack.c.bf16 %v194, %v190
    %v359 = vpack.c.bf16 %v195, %v191
    %v360 = vpack.c.bf16 %v196, %v192
    %v361 = vpack.c.bf16 %v197, %v193
    %v362 = vpack.c.bf16 %v202, %v198
    %v363 = vpack.c.bf16 %v203, %v199
    %v364 = vpack.c.bf16 %v204, %v200
    %v365 = vpack.c.bf16 %v205, %v201
    %v366 = vpack.c.bf16 %v210, %v206
    %v367 = vpack.c.bf16 %v211, %v207
    %v368 = vpack.c.bf16 %v212, %v208
    %v369 = vpack.c.bf16 %v213, %v209
    %v370 = vpack.c.bf16 %v218, %v214
    %v371 = vpack.c.bf16 %v219, %v215
    %v372 = vpack.c.bf16 %v220, %v216
    %v373 = vpack.c.bf16 %v221, %v217
    %v374 = vpack.c.bf16 %v226, %v222
    %v375 = vpack.c.bf16 %v227, %v223
    %v376 = vpack.c.bf16 %v228, %v224
    %v377 = vpack.c.bf16 %v229, %v225
    %v378 = vpack.c.bf16 %v234, %v230
    %v379 = vpack.c.bf16 %v235, %v231
    %v380 = vpack.c.bf16 %v236, %v232
    %v381 = vpack.c.bf16 %v237, %v233
    %v382 = vpack.c.bf16 %v242, %v238
    %v383 = vpack.c.bf16 %v243, %v239
    %v384 = vpack.c.bf16 %v244, %v240
    %v385 = vpack.c.bf16 %v245, %v241
    %v386 = vpack.c.bf16 %v250, %v246
    %v387 = vpack.c.bf16 %v251, %v247
    %v388 = vpack.c.bf16 %v252, %v248
    %v389 = vpack.c.bf16 %v253, %v249
    %v390 = vpack.c.bf16 %v258, %v254
    %v391 = vpack.c.bf16 %v259, %v255
    %v392 = vpack.c.bf16 %v260, %v256
    %v393 = vpack.c.bf16 %v261, %v257
    %v394 = vpack.c.bf16 %v266, %v262
    %v395 = vpack.c.bf16 %v267, %v263
    %v396 = vpack.c.bf16 %v268, %v264
    %v397 = vpack.c.bf16 %v269, %v265
    %v398 = vpack.c.bf16 %v274, %v270
    %v399 = vpack.c.bf16 %v275, %v271
    %v400 = vpack.c.bf16 %v276, %v272
    %v401 = vpack.c.bf16 %v277, %v273
    %v402 = vpack.c.bf16 %v282, %v278
    %v403 = vpack.c.bf16 %v283, %v279
    %v404 = vpack.c.bf16 %v284, %v280
    %v405 = vpack.c.bf16 %v285, %v281
    %v406 = vpack.c.bf16 %v290, %v286
    %v407 = vpack.c.bf16 %v291, %v287
    %v408 = vpack.c.bf16 %v292, %v288
    %v409 = vpack.c.bf16 %v293, %v289
    %v410 = vpack.c.bf16 %v298, %v294
    %v411 = vpack.c.bf16 %v299, %v295
    %v412 = vpack.c.bf16 %v300, %v296
    %v413 = vpack.c.bf16 %v301, %v297
    %v414 = vpack.c.bf16 %v306, %v302
    %v415 = vpack.c.bf16 %v307, %v303
    %v416 = vpack.c.bf16 %v308, %v304
    %v417 = vpack.c.bf16 %v309, %v305
    %v418 = vpack.c.bf16 %v314, %v310
    %v419 = vpack.c.bf16 %v315, %v311
    %v420 = vpack.c.bf16 %v316, %v312
    %v421 = vpack.c.bf16 %v317, %v313
    %v422 = vpack.c.bf16 %v322, %v318
    %v423 = vpack.c.bf16 %v323, %v319
    %v424 = vpack.c.bf16 %v324, %v320
    %v425 = vpack.c.bf16 %v325, %v321
    %426 = vxpose.xlu0.c.b16.start [1/8] %v101, 128
    %427 = vxpose.xlu0.c.b16.cont [2/8] %v102, 128
    %428 = vxpose.xlu0.c.b16.cont [3/8] %v103, 128
    %429 = vxpose.xlu0.c.b16.cont [4/8] %v104, 128
    %430 = vxpose.xlu0.c.b16.cont [5/8] %v105, 128
    %431 = vxpose.xlu0.c.b16.cont [6/8] %v106, 128
    %432 = vxpose.xlu0.c.b16.cont [7/8] %v107, 128
    %433 = vxpose.xlu0.c.b16.end [8/8] %v108, 128
    %v434 = vpop.trf.xlu0
    %v435 = vpop.trf.xlu0
    %v436 = vpop.trf.xlu0
    %v437 = vpop.trf.xlu0
    %v438 = vpop.trf.xlu0
    %v439 = vpop.trf.xlu0
    %v440 = vpop.trf.xlu0
    %v441 = vpop.trf.xlu0
    %442 = vxpose.xlu0.c.b16.start [1/8] %v109, 128
    %443 = vxpose.xlu0.c.b16.cont [2/8] %v110, 128
    %444 = vxpose.xlu0.c.b16.cont [3/8] %v111, 128
    %445 = vxpose.xlu0.c.b16.cont [4/8] %v112, 128
    %446 = vxpose.xlu0.c.b16.cont [5/8] %v113, 128
    %447 = vxpose.xlu0.c.b16.cont [6/8] %v114, 128
    %448 = vxpose.xlu0.c.b16.cont [7/8] %v115, 128
    %449 = vxpose.xlu0.c.b16.end [8/8] %v116, 128
    %v450 = vpop.trf.xlu0
    %v451 = vpop.trf.xlu0
    %v452 = vpop.trf.xlu0
    %v453 = vpop.trf.xlu0
    %v454 = vpop.trf.xlu0
    %v455 = vpop.trf.xlu0
    %v456 = vpop.trf.xlu0
    %v457 = vpop.trf.xlu0
    %458 = vxpose.xlu0.c.b16.start [1/8] %v117, 128
    %459 = vxpose.xlu0.c.b16.cont [2/8] %v118, 128
    %460 = vxpose.xlu0.c.b16.cont [3/8] %v119, 128
    %461 = vxpose.xlu0.c.b16.cont [4/8] %v120, 128
    %462 = vxpose.xlu0.c.b16.cont [5/8] %v121, 128
    %463 = vxpose.xlu0.c.b16.cont [6/8] %v122, 128
    %464 = vxpose.xlu0.c.b16.cont [7/8] %v123, 128
    %465 = vxpose.xlu0.c.b16.end [8/8] %v124, 128
    %v466 = vpop.trf.xlu0
    %v467 = vpop.trf.xlu0
    %v468 = vpop.trf.xlu0
    %v469 = vpop.trf.xlu0
    %v470 = vpop.trf.xlu0
    %v471 = vpop.trf.xlu0
    %v472 = vpop.trf.xlu0
    %v473 = vpop.trf.xlu0
    %474 = vxpose.xlu0.c.b16.start [1/8] %v125, 128
    %475 = vxpose.xlu0.c.b16.cont [2/8] 0, 128
    %476 = vxpose.xlu0.c.b16.cont [3/8] 0, 128
    %477 = vxpose.xlu0.c.b16.cont [4/8] 0, 128
    %478 = vxpose.xlu0.c.b16.cont [5/8] 0, 128
    %479 = vxpose.xlu0.c.b16.cont [6/8] 0, 128
    %480 = vxpose.xlu0.c.b16.cont [7/8] 0, 128
    %481 = vxpose.xlu0.c.b16.end [8/8] 0, 128
    %v482 = vpop.trf.xlu0
    %v483 = vpop.trf.xlu0
    %v484 = vpop.trf.xlu0
    %v485 = vpop.trf.xlu0
    %v486 = vpop.trf.xlu0
    %v487 = vpop.trf.xlu0
    %v488 = vpop.trf.xlu0
    %v489 = vpop.trf.xlu0
    %vm490 = vcmask 130048
    %v492 = vsel %vm490, %v482, 0
    %v495 = vsel %vm490, %v483, 0
    %v498 = vsel %vm490, %v484, 0
    %v501 = vsel %vm490, %v485, 0
    %v504 = vsel %vm490, %v329, 0
    %v507 = vsel %vm490, %v333, 0
    %v510 = vsel %vm490, %v337, 0
    %v513 = vsel %vm490, %v341, 0
    %v516 = vsel %vm490, %v345, 0
    %v519 = vsel %vm490, %v349, 0
    %v522 = vsel %vm490, %v353, 0
    %v525 = vsel %vm490, %v357, 0
    %v528 = vsel %vm490, %v361, 0
    %v531 = vsel %vm490, %v365, 0
    %v534 = vsel %vm490, %v369, 0
    %v537 = vsel %vm490, %v373, 0
    %v540 = vsel %vm490, %v377, 0
    %v543 = vsel %vm490, %v381, 0
    %v546 = vsel %vm490, %v385, 0
    %v549 = vsel %vm490, %v389, 0
    %v552 = vsel %vm490, %v393, 0
    %v555 = vsel %vm490, %v397, 0
    %v558 = vsel %vm490, %v401, 0
    %v561 = vsel %vm490, %v405, 0
    %v564 = vsel %vm490, %v409, 0
    %v567 = vsel %vm490, %v413, 0
    %v570 = vsel %vm490, %v417, 0
    %v573 = vsel %vm490, %v421, 0
    %v576 = vsel %vm490, %v425, 0
    %578 = vmatprep.subr.bf16.mxu0 %v327
    %579 = vmatpush1.bf16.xpose.msra.mxu0 %v326
    %580 = vmatprep.subr.bf16.mxu0 %v331
    %581 = vmatpush1.bf16.xpose.msra.mxu0 %v330
    %582 = vmatprep.subr.bf16.mxu0 %v335
    %583 = vmatpush1.bf16.xpose.msra.mxu0 %v334
    %584 = vmatprep.subr.bf16.mxu0 %v339
    %585 = vmatpush1.bf16.xpose.msra.mxu0 %v338
    %586 = vmatprep.subr.bf16.mxu0 %v343
    %587 = vmatpush1.bf16.xpose.msra.mxu0 %v342
    %588 = vmatprep.subr.bf16.mxu0 %v347
    %589 = vmatpush1.bf16.xpose.msra.mxu0 %v346
    %590 = vmatprep.subr.bf16.mxu0 %v351
    %591 = vmatpush1.bf16.xpose.msra.mxu0 %v350
    %592 = vmatprep.subr.bf16.mxu0 %v355
    %593 = vmatpush1.bf16.xpose.msra.mxu0 %v354
    %594 = vmatprep.subr.bf16.mxu0 %v359
    %595 = vmatpush1.bf16.xpose.msra.mxu0 %v358
    %596 = vmatprep.subr.bf16.mxu0 %v363
    %597 = vmatpush1.bf16.xpose.msra.mxu0 %v362
    %598 = vmatprep.subr.bf16.mxu0 %v367
    %599 = vmatpush1.bf16.xpose.msra.mxu0 %v366
    %600 = vmatprep.subr.bf16.mxu0 %v371
    %601 = vmatpush1.bf16.xpose.msra.mxu0 %v370
    %602 = vmatprep.subr.bf16.mxu0 %v375
    %603 = vmatpush1.bf16.xpose.msra.mxu0 %v374
    %604 = vmatprep.subr.bf16.mxu0 %v379
    %605 = vmatpush1.bf16.xpose.msra.mxu0 %v378
    %606 = vmatprep.subr.bf16.mxu0 %v383
    %607 = vmatpush1.bf16.xpose.msra.mxu0 %v382
    %608 = vmatprep.subr.bf16.mxu0 %v387
    %609 = vmatpush1.bf16.xpose.msra.mxu0 %v386
    %610 = vmatprep.mubr.bf16.mxu0 %v450
    %611 = vmatmul.mubr.bf16.gmra.mrb[0].mxu0 %v434
    %v612 = vpop.f32.mrb[0].mxu0
    %v613 = vadd.f32 0.0, %v612
    %v614 = vpop.f32.mrb[0].mxu0
    %v615 = vadd.f32 0.0, %v614
    %v616 = vpop.f32.mrb[0].mxu0
    %v617 = vadd.f32 0.0, %v616
    %v618 = vpop.f32.mrb[0].mxu0
    %v619 = vadd.f32 0.0, %v618
    %620 = vmatprep.mubr.bf16.mxu0 %v451
    %621 = vmatmul.mubr.bf16.gmra.mrb[0].mxu0 %v435
    %v622 = vpop.f32.mrb[0].mxu0
    %v623 = vadd.f32 0.0, %v622
    %v624 = vpop.f32.mrb[0].mxu0
    %v625 = vadd.f32 0.0, %v624
    %v626 = vpop.f32.mrb[0].mxu0
    %v627 = vadd.f32 0.0, %v626
    %v628 = vpop.f32.mrb[0].mxu0
    %v629 = vadd.f32 0.0, %v628
    %630 = vmatprep.mubr.bf16.mxu0 %v452
    %631 = vmatmul.mubr.bf16.gmra.mrb[0].mxu0 %v436
    %v632 = vpop.f32.mrb[0].mxu0
    %v633 = vadd.f32 0.0, %v632
    %v634 = vpop.f32.mrb[0].mxu0
    %v635 = vadd.f32 0.0, %v634
    %v636 = vpop.f32.mrb[0].mxu0
    %v637 = vadd.f32 0.0, %v636
    %v638 = vpop.f32.mrb[0].mxu0
    %v639 = vadd.f32 0.0, %v638
    %640 = vmatprep.mubr.bf16.mxu0 %v453
    %641 = vmatmul.mubr.bf16.gmra.mrb[0].mxu0 %v437
    %v642 = vpop.f32.mrb[0].mxu0
    %v643 = vadd.f32 0.0, %v642
    %v644 = vpop.f32.mrb[0].mxu0
    %v645 = vadd.f32 0.0, %v644
    %v646 = vpop.f32.mrb[0].mxu0
    %v647 = vpop.f32.mrb[0].mxu0
    %648 = vdwg.mxu0
    %649 = vmatprep.subr.bf16.mxu0 %v504
    %650 = vmatpush1.bf16.xpose.msra.mxu0 %v328
    %651 = vmatprep.subr.bf16.mxu0 %v507
    %652 = vmatpush1.bf16.xpose.msra.mxu0 %v332
    %653 = vmatprep.subr.bf16.mxu0 %v510
    %654 = vmatpush1.bf16.xpose.msra.mxu0 %v336
    %655 = vmatprep.subr.bf16.mxu0 %v513
    %656 = vmatpush1.bf16.xpose.msra.mxu0 %v340
    %657 = vmatprep.subr.bf16.mxu0 %v516
    %658 = vmatpush1.bf16.xpose.msra.mxu0 %v344
    %659 = vmatprep.subr.bf16.mxu0 %v519
    %660 = vmatpush1.bf16.xpose.msra.mxu0 %v348
    %661 = vmatprep.subr.bf16.mxu0 %v522
    %662 = vmatpush1.bf16.xpose.msra.mxu0 %v352
    %663 = vmatprep.subr.bf16.mxu0 %v525
    %664 = vmatpush1.bf16.xpose.msra.mxu0 %v356
    %665 = vmatprep.subr.bf16.mxu0 %v528
    %666 = vmatpush1.bf16.xpose.msra.mxu0 %v360
    %667 = vmatprep.subr.bf16.mxu0 %v531
    %668 = vmatpush1.bf16.xpose.msra.mxu0 %v364
    %669 = vmatprep.subr.bf16.mxu0 %v534
    %670 = vmatpush1.bf16.xpose.msra.mxu0 %v368
    %671 = vmatprep.subr.bf16.mxu0 %v537
    %672 = vmatpush1.bf16.xpose.msra.mxu0 %v372
    %673 = vmatprep.subr.bf16.mxu0 %v540
    %674 = vmatpush1.bf16.xpose.msra.mxu0 %v376
    %675 = vmatprep.subr.bf16.mxu0 %v543
    %676 = vmatpush1.bf16.xpose.msra.mxu0 %v380
    %677 = vmatprep.subr.bf16.mxu0 %v546
    %678 = vmatpush1.bf16.xpose.msra.mxu0 %v384
    %679 = vmatprep.subr.bf16.mxu0 %v549
    %680 = vmatpush1.bf16.xpose.msra.mxu0 %v388
    %681 = vmatprep.mubr.bf16.mxu0 %v492
    %682 = vmatmul.mubr.bf16.gmra.mrb[0].mxu0 %v466
    %v683 = vpop.f32.mrb[0].mxu0
    %v684 = vadd.f32 %v613, %v683
    %v685 = vpop.f32.mrb[0].mxu0
    %v686 = vadd.f32 %v615, %v685
    %v687 = vpop.f32.mrb[0].mxu0
    %v688 = vadd.f32 %v617, %v687
    %v689 = vpop.f32.mrb[0].mxu0
    %v690 = vadd.f32 %v619, %v689
    %691 = vmatprep.mubr.bf16.mxu0 %v495
    %692 = vmatmul.mubr.bf16.gmra.mrb[0].mxu0 %v467
    %v693 = vpop.f32.mrb[0].mxu0
    %v694 = vadd.f32 %v623, %v693
    %v695 = vpop.f32.mrb[0].mxu0
    %v696 = vadd.f32 %v625, %v695
    %v697 = vpop.f32.mrb[0].mxu0
    %v698 = vadd.f32 %v627, %v697
    %v699 = vpop.f32.mrb[0].mxu0
    %v700 = vadd.f32 %v629, %v699
    %701 = vmatprep.mubr.bf16.mxu0 %v498
    %702 = vmatmul.mubr.bf16.gmra.mrb[0].mxu0 %v468
    %v703 = vpop.f32.mrb[0].mxu0
    %v704 = vadd.f32 %v633, %v703
    %v705 = vpop.f32.mrb[0].mxu0
    %v706 = vadd.f32 %v635, %v705
    %v707 = vpop.f32.mrb[0].mxu0
    %v708 = vadd.f32 %v637, %v707
    %v709 = vpop.f32.mrb[0].mxu0
    %v710 = vadd.f32 %v639, %v709
    %711 = vmatprep.mubr.bf16.mxu0 %v501
    %712 = vmatmul.mubr.bf16.gmra.mrb[0].mxu0 %v469
    %v713 = vpop.f32.mrb[0].mxu0
    %v714 = vadd.f32 %v643, %v713
    %v715 = vpop.f32.mrb[0].mxu0
    %v716 = vadd.f32 %v645, %v715
    %v717 = vpop.f32.mrb[0].mxu0
    %v718 = vpop.f32.mrb[0].mxu0
    %719 = vdwg.mxu0
    %720 = vmatprep.subr.bf16.mxu0 %v391
    %721 = vmatpush1.bf16.xpose.msra.mxu0 %v390
    %722 = vmatprep.subr.bf16.mxu0 %v395
    %723 = vmatpush1.bf16.xpose.msra.mxu0 %v394
    %724 = vmatprep.subr.bf16.mxu0 %v399
    %725 = vmatpush1.bf16.xpose.msra.mxu0 %v398
    %726 = vmatprep.subr.bf16.mxu0 %v403
    %727 = vmatpush1.bf16.xpose.msra.mxu0 %v402
    %728 = vmatprep.subr.bf16.mxu0 %v407
    %729 = vmatpush1.bf16.xpose.msra.mxu0 %v406
    %730 = vmatprep.subr.bf16.mxu0 %v411
    %731 = vmatpush1.bf16.xpose.msra.mxu0 %v410
    %732 = vmatprep.subr.bf16.mxu0 %v415
    %733 = vmatpush1.bf16.xpose.msra.mxu0 %v414
    %734 = vmatprep.subr.bf16.mxu0 %v419
    %735 = vmatpush1.bf16.xpose.msra.mxu0 %v418
    %736 = vmatprep.subr.bf16.mxu0 %v423
    %737 = vmatpush1.bf16.xpose.msra.mxu0 %v422
    %738 = vmatprep.subr.bf16.mxu0 0
    %739 = vmatpush1.bf16.xpose.msra.mxu0 0
    %740 = vmatprep.subr.bf16.mxu0 0
    %741 = vmatpush1.bf16.xpose.msra.mxu0 0
    %742 = vmatprep.subr.bf16.mxu0 0
    %743 = vmatpush1.bf16.xpose.msra.mxu0 0
    %744 = vmatprep.subr.bf16.mxu0 0
    %745 = vmatpush1.bf16.xpose.msra.mxu0 0
    %746 = vmatprep.subr.bf16.mxu0 0
    %747 = vmatpush1.bf16.xpose.msra.mxu0 0
    %748 = vmatprep.subr.bf16.mxu0 0
    %749 = vmatpush1.bf16.xpose.msra.mxu0 0
    %750 = vmatprep.subr.bf16.mxu0 0
    %751 = vmatpush1.bf16.xpose.msra.mxu0 0
    %752 = vmatprep.mubr.bf16.mxu0 %v450
    %753 = vmatmul.mubr.bf16.gmra.mrb[0].mxu0 %v434
    %v754 = vpop.f32.mrb[0].mxu0
    %v755 = vadd.f32 0.0, %v754
    %v756 = vpop.f32.mrb[0].mxu0
    %v757 = vadd.f32 0.0, %v756
    %v758 = vpop.f32.mrb[0].mxu0
    %v759 = vadd.f32 0.0, %v758
    %v760 = vpop.f32.mrb[0].mxu0
    %v761 = vadd.f32 0.0, %v760
    %762 = vmatprep.mubr.bf16.mxu0 %v451
    %763 = vmatmul.mubr.bf16.gmra.mrb[0].mxu0 %v435
    %v764 = vpop.f32.mrb[0].mxu0
    %v765 = vadd.f32 0.0, %v764
    %v766 = vpop.f32.mrb[0].mxu0
    %v767 = vadd.f32 0.0, %v766
    %v768 = vpop.f32.mrb[0].mxu0
    %v769 = vadd.f32 0.0, %v768
    %v770 = vpop.f32.mrb[0].mxu0
    %v771 = vadd.f32 0.0, %v770
    %772 = vmatprep.mubr.bf16.mxu0 %v452
    %773 = vmatmul.mubr.bf16.gmra.mrb[0].mxu0 %v436
    %v774 = vpop.f32.mrb[0].mxu0
    %v775 = vadd.f32 0.0, %v774
    %v776 = vpop.f32.mrb[0].mxu0
    %v777 = vadd.f32 0.0, %v776
    %v778 = vpop.f32.mrb[0].mxu0
    %v779 = vadd.f32 0.0, %v778
    %v780 = vpop.f32.mrb[0].mxu0
    %v781 = vadd.f32 0.0, %v780
    %782 = vmatprep.mubr.bf16.mxu0 %v453
    %783 = vmatmul.mubr.bf16.gmra.mrb[0].mxu0 %v437
    %v784 = vpop.f32.mrb[0].mxu0
    %v785 = vadd.f32 0.0, %v784
    %v786 = vpop.f32.mrb[0].mxu0
    %v787 = vadd.f32 0.0, %v786
    %v788 = vpop.f32.mrb[0].mxu0
    %v789 = vpop.f32.mrb[0].mxu0
    %790 = vdwg.mxu0
    %791 = vmatprep.subr.bf16.mxu0 %v552
    %792 = vmatpush1.bf16.xpose.msra.mxu0 %v392
    %793 = vmatprep.subr.bf16.mxu0 %v555
    %794 = vmatpush1.bf16.xpose.msra.mxu0 %v396
    %795 = vmatprep.subr.bf16.mxu0 %v558
    %796 = vmatpush1.bf16.xpose.msra.mxu0 %v400
    %797 = vmatprep.subr.bf16.mxu0 %v561
    %798 = vmatpush1.bf16.xpose.msra.mxu0 %v404
    %799 = vmatprep.subr.bf16.mxu0 %v564
    %800 = vmatpush1.bf16.xpose.msra.mxu0 %v408
    %801 = vmatprep.subr.bf16.mxu0 %v567
    %802 = vmatpush1.bf16.xpose.msra.mxu0 %v412
    %803 = vmatprep.subr.bf16.mxu0 %v570
    %804 = vmatpush1.bf16.xpose.msra.mxu0 %v416
    %805 = vmatprep.subr.bf16.mxu0 %v573
    %806 = vmatpush1.bf16.xpose.msra.mxu0 %v420
    %807 = vmatprep.subr.bf16.mxu0 %v576
    %808 = vmatpush1.bf16.xpose.msra.mxu0 %v424
    %809 = vmatprep.subr.bf16.mxu0 0
    %810 = vmatpush1.bf16.xpose.msra.mxu0 0
    %811 = vmatprep.subr.bf16.mxu0 0
    %812 = vmatpush1.bf16.xpose.msra.mxu0 0
    %813 = vmatprep.subr.bf16.mxu0 0
    %814 = vmatpush1.bf16.xpose.msra.mxu0 0
    %815 = vmatprep.subr.bf16.mxu0 0
    %816 = vmatpush1.bf16.xpose.msra.mxu0 0
    %817 = vmatprep.subr.bf16.mxu0 0
    %818 = vmatpush1.bf16.xpose.msra.mxu0 0
    %819 = vmatprep.subr.bf16.mxu0 0
    %820 = vmatpush1.bf16.xpose.msra.mxu0 0
    %821 = vmatprep.subr.bf16.mxu0 0
    %822 = vmatpush1.bf16.xpose.msra.mxu0 0
    %823 = vmatprep.mubr.bf16.mxu0 %v492
    %824 = vmatmul.mubr.bf16.gmra.mrb[0].mxu0 %v466
    %v825 = vpop.f32.mrb[0].mxu0
    %v826 = vadd.f32 %v755, %v825
    %v827 = vpop.f32.mrb[0].mxu0
    %v828 = vadd.f32 %v757, %v827
    %v829 = vpop.f32.mrb[0].mxu0
    %v830 = vadd.f32 %v759, %v829
    %v831 = vpop.f32.mrb[0].mxu0
    %v832 = vadd.f32 %v761, %v831
    %833 = vmatprep.mubr.bf16.mxu0 %v495
    %834 = vmatmul.mubr.bf16.gmra.mrb[0].mxu0 %v467
    %v835 = vpop.f32.mrb[0].mxu0
    %v836 = vadd.f32 %v765, %v835
    %v837 = vpop.f32.mrb[0].mxu0
    %v838 = vadd.f32 %v767, %v837
    %v839 = vpop.f32.mrb[0].mxu0
    %v840 = vadd.f32 %v769, %v839
    %v841 = vpop.f32.mrb[0].mxu0
    %v842 = vadd.f32 %v771, %v841
    %843 = vmatprep.mubr.bf16.mxu0 %v498
    %844 = vmatmul.mubr.bf16.gmra.mrb[0].mxu0 %v468
    %v845 = vpop.f32.mrb[0].mxu0
    %v846 = vadd.f32 %v775, %v845
    %v847 = vpop.f32.mrb[0].mxu0
    %v848 = vadd.f32 %v777, %v847
    %v849 = vpop.f32.mrb[0].mxu0
    %v850 = vadd.f32 %v779, %v849
    %v851 = vpop.f32.mrb[0].mxu0
    %v852 = vadd.f32 %v781, %v851
    %853 = vmatprep.mubr.bf16.mxu0 %v501
    %854 = vmatmul.mubr.bf16.gmra.mrb[0].mxu0 %v469
    %v855 = vpop.f32.mrb[0].mxu0
    %v856 = vadd.f32 %v785, %v855
    %v857 = vpop.f32.mrb[0].mxu0
    %v858 = vadd.f32 %v787, %v857
    %v859 = vpop.f32.mrb[0].mxu0
    %v860 = vpop.f32.mrb[0].mxu0
    %861 = vdwg.mxu0
    %862 = vst [vmem:[%s2] sm:$0xff] %v684
    %863 = vst [vmem:[%s2 + $0x8] sm:$0xff] %v686
    %864 = vst [vmem:[%s2 + $0x10] sm:$0xff] %v826
    %865 = vst.msk [vmem:[%s2 + $0x18] sm:$0xff] %vm490, %v828
    %866 = vst [vmem:[%s2 + $0x20] sm:$0xff] %v688
    %867 = vst [vmem:[%s2 + $0x28] sm:$0xff] %v690
    %868 = vst [vmem:[%s2 + $0x30] sm:$0xff] %v830
    %869 = vst.msk [vmem:[%s2 + $0x38] sm:$0xff] %vm490, %v832
    %870 = vst [vmem:[%s2 + $0x40] sm:$0xff] %v694
    %871 = vst [vmem:[%s2 + $0x48] sm:$0xff] %v696
    %872 = vst [vmem:[%s2 + $0x50] sm:$0xff] %v836
    %873 = vst.msk [vmem:[%s2 + $0x58] sm:$0xff] %vm490, %v838
    %874 = vst [vmem:[%s2 + $0x60] sm:$0xff] %v698
    %875 = vst [vmem:[%s2 + $0x68] sm:$0xff] %v700
    %876 = vst [vmem:[%s2 + $0x70] sm:$0xff] %v840
    %877 = vst.msk [vmem:[%s2 + $0x78] sm:$0xff] %vm490, %v842
    %878 = vst [vmem:[%s2 + $0x80] sm:$0xff] %v704
    %879 = vst [vmem:[%s2 + $0x88] sm:$0xff] %v706
    %880 = vst [vmem:[%s2 + $0x90] sm:$0xff] %v846
    %881 = vst.msk [vmem:[%s2 + $0x98] sm:$0xff] %vm490, %v848
    %882 = vst [vmem:[%s2 + $0xa0] sm:$0xff] %v708
    %883 = vst [vmem:[%s2 + $0xa8] sm:$0xff] %v710
    %884 = vst [vmem:[%s2 + $0xb0] sm:$0xff] %v850
    %885 = vst.msk [vmem:[%s2 + $0xb8] sm:$0xff] %vm490, %v852
    %886 = vst [vmem:[%s2 + $0xc0] sm:$0x1] %v714
    %887 = vst [vmem:[%s2 + $0xc8] sm:$0x1] %v716
    %888 = vst [vmem:[%s2 + $0xd0] sm:$0x1] %v856
    %vm889 = vcmask 122880
    %890 = vst.msk [vmem:[%s2 + $0xd8] sm:$0x1] %vm889, %v858
    // Predicated region
    $region14: #{tpu_custom_call.1} parent=1 // pred_check
      _
    $region15: #{tpu_custom_call.1} parent=1 // pred_check_branch
      %892 = sbr.rel (0) target = $region17
    $region16: #{tpu_custom_call.1} parent=1 // pred_region
      _
    $region17: #{tpu_custom_call.1} parent=1 // pred_fallthru
      _
    // Predicated region
    $region18: #{tpu_custom_call.1} parent=1 // pred_check
      _
    $region19: #{tpu_custom_call.1} parent=1 // pred_check_branch
      %894 = sbr.rel (0) target = $region21
    $region20: #{tpu_custom_call.1} parent=1 // pred_region
      _
    $region21: #{tpu_custom_call.1} parent=1 // pred_fallthru
      _
    %895 = vsyncpa [#allocation3], 1

</llo_original>
